<compile_context>
chip_gen: v5e
topology: v5e:2x2
jax: 0.10.0
libtpu: 0.0.40
codegen_flags: <defaults>
</compile_context>

<pallas_src>
import numpy as np
import jax
import jax.numpy as jnp
from jax.experimental import pallas as pl
from jax.experimental.pallas import tpu as pltpu


def _round_up(x, m):
    return ((x + m - 1) // m) * m


def _vmem_capacity_bytes():
    try:
        return int(pltpu.get_tpu_info().vmem_capacity_bytes)
    except Exception:
        return 64 * 1024 * 1024  # conservative default (v7x per-core VMEM)


def _choose_set_tile(B, ncmax, din_pad, H):
    """Largest set-axis tile (multiple of 8) whose double-buffered streamed
    operands + working set fit comfortably in VMEM; targets ~1024 flattened
    (B*tile) rows per grid step to amortize the ~0.35us per-step overhead."""
    cap = _round_up(ncmax, 8)
    budget = _vmem_capacity_bytes() // 2

    def footprint(t):
        streamed = 2 * (B * t * din_pad * 2 + t * 4)   # zcf (bf16) + scale (f32), 2x buffered
        working = 2 * B * t * H * 4                    # h intermediates (f32)
        return streamed + working

    tile = min(cap, max(8, _round_up(max(1, 1024 // max(B, 1)), 8)))
    while tile > 8 and footprint(tile) > budget:
        tile -= 8
    return tile


def _derive_vmem_limit(B, set_tile, din_pad, H, dz):
    bf16, f32 = 2, 4
    streamed = 2 * (B * set_tile * din_pad * bf16 + set_tile * f32)
    weights = 2 * (din_pad * H * bf16 + H * f32 + H * dz * f32 + dz * f32)
    resident = B * dz * f32 + B * H * f32
    working = 2 * B * set_tile * H * f32
    limit = max(4 * 1024 * 1024, 2 * (streamed + weights + resident + working))
    return min(limit, int(0.9 * _vmem_capacity_bytes()))


def _mm_cnp_encoder_kernel(zcf_ref, scale_ref, w1_ref, b1_ref, w2_ref, b2_ref,
                           zc_ref, pooled_ref):
    """Grid = (mode, set_tile); both axes are reductions ("arbitrary").

    zcf_ref   : (B, tn, Din_pad) bf16   this mode/tile's [xc || yc], zero padded
    scale_ref : (tn, 1)          f32    1/Nc_m on valid set rows, 0 on padding
    w1_ref    : (Din_pad, H)     bf16   layer-1 weight (padded rows zeroed)
    b1_ref    : (1, H)           f32
    w2_ref    : (H, dz)          f32    (tiny; kept f32 for accuracy)
    b2_ref    : (1, dz)          f32
    zc_ref    : (B, dz)          f32    VMEM-resident output = mode accumulator
    pooled_ref: (B, H)           f32    scratch: per-mode masked-mean accumulator
    """
    m = pl.program_id(0)
    s = pl.program_id(1)
    last_s = pl.num_programs(1) - 1

    @pl.when(jnp.logical_and(m == 0, s == 0))
    def _init_out():
        zc_ref[...] = jnp.zeros_like(zc_ref)

    @pl.when(s == 0)
    def _init_pool():
        pooled_ref[...] = jnp.zeros_like(pooled_ref)

    B, tn, dpad = zcf_ref.shape
    H = w1_ref.shape[-1]

    # DeepSet phi layer 1: one bf16 MXU matmul with f32 accumulation.
    h = jnp.dot(zcf_ref[...].reshape(B * tn, dpad), w1_ref[...],
                preferred_element_type=jnp.float32)
    h = jnp.maximum(h + b1_ref[...], 0.0)                         # (B*tn, H)

    # Masked mean over the context set: VPU scale + XLU reduce (no pool matmul).
    # Padded rows produce ReLU(b1) != 0 but carry scale 0, so they contribute 0.
    h = h.reshape(B, tn, H) * scale_ref[...][None, :, :]
    pooled_ref[...] += jnp.sum(h, axis=1)                         # (B, H)

    # Layer 2 AFTER pooling (mean hoisted through the affine map), once per mode.
    @pl.when(s == last_s)
    def _layer2():
        zc_ref[...] += (jnp.dot(pooled_ref[...], w2_ref[...],
                                preferred_element_type=jnp.float32)
                        + b2_ref[...])


def multimodal_cnp_encoder(xc, yc, xt, params, mode_names, *, set_tile=None):
    """JAX/Pallas forward mirroring MultiModalCNPEncoder.forward.

    x_encoder / y_encoder are Identity (module defaults), so the torch-side
    cat -> encode -> split of x is a no-op and is elided entirely.
    """
    B, nt, dx = xt.shape
    dy = yc[mode_names[0]].shape[-1]
    din = dx + dy
    H = params[mode_names[0]]["w1"].shape[1]
    dz = params[mode_names[0]]["w2"].shape[1]
    M = len(mode_names)

    nc_list = [int(xc[m].shape[-2]) for m in mode_names]
    if any(n <= 0 for n in nc_list):
        raise ValueError("every mode needs at least one context point (Nc > 0)")
    ncmax = max(nc_list)

    din_pad = _round_up(din, 8)                    # f32/bf16 sublane-friendly K
    if set_tile is None:
        set_tile = _choose_set_tile(B, ncmax, din_pad, H)
    set_tile = max(8, _round_up(set_tile, 8))
    ncmax_pad = _round_up(ncmax, set_tile)
    n_set = ncmax_pad // set_tile

    # Contexts: [xc || yc], set axis zero-padded to ncmax_pad, feature axis
    # zero-padded to din_pad, stored bf16 (the dominant HBM traffic).
    zcf = jnp.stack([
        jnp.pad(jnp.concatenate([xc[m], yc[m]], axis=-1).astype(jnp.float32),
                ((0, 0), (0, ncmax_pad - n), (0, din_pad - din)))
        for m, n in zip(mode_names, nc_list)
    ]).astype(jnp.bfloat16)                        # (M, B, ncmax_pad, din_pad)

    # Per-mode masked-mean weights (batch-invariant): 1/Nc_m on valid rows, 0 on pad.
    nc_arr = np.asarray(nc_list, np.float32)
    pos = np.arange(ncmax_pad, dtype=np.float32)
    scale = np.where(pos[None, :] < nc_arr[:, None], 1.0 / nc_arr[:, None], 0.0)
    scale = jnp.asarray(scale[:, :, None], jnp.float32)            # (M, ncmax_pad, 1)

    # Per-mode DeepSet parameters.  W1 input rows zero-padded to din_pad.
    w1 = jnp.stack([
        jnp.pad(params[m]["w1"].astype(jnp.float32), ((0, din_pad - din), (0, 0)))
        for m in mode_names
    ]).astype(jnp.bfloat16)                                        # (M, din_pad, H)
    b1 = jnp.stack([params[m]["b1"] for m in mode_names]).reshape(M, 1, H).astype(jnp.float32)
    w2 = jnp.stack([params[m]["w2"] for m in mode_names]).astype(jnp.float32)   # (M, H, dz)
    b2 = jnp.stack([params[m]["b2"] for m in mode_names]).reshape(M, 1, dz).astype(jnp.float32)

    grid_spec = pltpu.PrefetchScalarGridSpec(
        num_scalar_prefetch=0,
        grid=(M, n_set),                                           # set axis innermost
        in_specs=[
            pl.BlockSpec((None, B, set_tile, din_pad), lambda m, s: (m, 0, s, 0)),  # zcf
            pl.BlockSpec((None, set_tile, 1), lambda m, s: (m, s, 0)),              # scale
            pl.BlockSpec((None, din_pad, H), lambda m, s: (m, 0, 0)),               # w1
            pl.BlockSpec((None, 1, H), lambda m, s: (m, 0, 0)),                     # b1
            pl.BlockSpec((None, H, dz), lambda m, s: (m, 0, 0)),                    # w2
            pl.BlockSpec((None, 1, dz), lambda m, s: (m, 0, 0)),                    # b2
        ],
        out_specs=pl.BlockSpec((B, dz), lambda m, s: (0, 0)),      # resident accumulator
        scratch_shapes=[pltpu.VMEM((B, H), jnp.float32)],
    )

    zc = pl.pallas_call(
        _mm_cnp_encoder_kernel,
        grid_spec=grid_spec,
        out_shape=jax.ShapeDtypeStruct((B, dz), jnp.float32),
        compiler_params=pltpu.CompilerParams(
            # Both grid axes accumulate into resident buffers -> reductions.
            dimension_semantics=("arbitrary", "arbitrary"),
            vmem_limit_bytes=_derive_vmem_limit(B, set_tile, din_pad, H, dz),
        ),
    )(zcf, scale, w1, b1, w2, b2)

    # einops.repeat + torch.cat epilogue: pure layout movement, done in XLA so
    # xt and the lane-sparse (B, nt, dz+dx) slab never sit resident in VMEM.
    zc_rep = jnp.broadcast_to(zc[:, None, :], (B, nt, dz))
    return jnp.concatenate([zc_rep, xt.astype(zc.dtype)], axis=-1)


# ------------------------- pure-JAX reference ------------------------------ #

def _forward_ref(xc, yc, xt, params, mode_names, *, match_bf16):
    zc = None
    for m in mode_names:
        z_in = jnp.concatenate([xc[m], yc[m]], axis=-1)
        w1 = params[m]["w1"]
        if match_bf16:   # mirror the kernel's bf16 storage of streamed operands
            z_in = z_in.astype(jnp.bfloat16).astype(jnp.float32)
            w1 = w1.astype(jnp.bfloat16).astype(jnp.float32)
        h = jax.nn.relu(z_in @ w1 + params[m]["b1"])
        o = h @ params[m]["w2"] + params[m]["b2"]
        z = o.mean(axis=1)
        zc = z if zc is None else zc + z
    B, nt, _ = xt.shape
    zc_rep = jnp.broadcast_to(zc[:, None, :], (B, nt, zc.shape[-1]))
    return jnp.concatenate([zc_rep, xt], axis=-1)


if __name__ == "__main__":
    # Small shapes consistent with the module.
    B, dx, dy = 2, 4, 3          # batch, x-dim, y-dim
    H, dz = 32, 16               # DeepSet hidden width, latent dim
    nt = 8                       # number of targets
    mode_names = ["audio", "video"]
    nc_per_mode = {"audio": 12, "video": 6}   # ragged per-mode context sizes

    key = jax.random.PRNGKey(0)
    k_data, k_par = jax.random.split(key)
    kd = jax.random.split(k_data, 2 * len(mode_names) + 1)

    xc, yc = {}, {}
    for i, m in enumerate(mode_names):
        xc[m] = jax.random.normal(kd[2 * i], (B, nc_per_mode[m], dx), jnp.float32)
        yc[m] = jax.random.normal(kd[2 * i + 1], (B, nc_per_mode[m], dy), jnp.float32)
    xt = jax.random.normal(kd[-1], (B, nt, dx), jnp.float32)

    din = dx + dy
    params = {}
    for m, kp in zip(mode_names, jax.random.split(k_par, len(mode_names))):
        k1, k2, k3, k4 = jax.random.split(kp, 4)
        params[m] = {
            "w1": jax.random.normal(k1, (din, H), jnp.float32) / np.sqrt(din),
            "b1": jax.random.normal(k2, (H,), jnp.float32) * 0.01,
            "w2": jax.random.normal(k3, (H, dz), jnp.float32) / np.sqrt(H),
            "b2": jax.random.normal(k4, (dz,), jnp.float32) * 0.01,
        }

    # set_tile=8 forces multiple set tiles even at this toy size (ncmax_pad=16),
    # exercising the tiled-reduction + padded-row masking paths.
    zt = multimodal_cnp_encoder(xc, yc, xt, params, mode_names, set_tile=8)
    zt = jax.block_until_ready(zt)
    assert zt.shape == (B, nt, dz + dx), zt.shape

    # Tight check vs. a reference matching the kernel's bf16 operand storage
    # (validates kernel logic), then a loose check vs. the pure-f32 forward.
    zt_ref_bf16 = _forward_ref(xc, yc, xt, params, mode_names, match_bf16=True)
    np.testing.assert_allclose(np.asarray(zt), np.asarray(zt_ref_bf16),
                               rtol=1e-3, atol=1e-3)
    zt_ref_f32 = _forward_ref(xc, yc, xt, params, mode_names, match_bf16=False)
    np.testing.assert_allclose(np.asarray(zt), np.asarray(zt_ref_f32),
                               rtol=5e-2, atol=5e-2)

    print("KERNEL_OK")
</pallas_src>

<mosaic_0001>
module attributes {stable_mosaic.version = 11 : i64} {
  func.func @_mm_cnp_encoder_kernel(%arg0: i32, %arg1: i32, %arg2: memref<1x2x8x8xbf16, #tpu.memory_space<vmem>>, %arg3: memref<1x8x1xf32, #tpu.memory_space<vmem>>, %arg4: memref<1x8x32xbf16, #tpu.memory_space<vmem>>, %arg5: memref<1x1x32xf32, #tpu.memory_space<vmem>>, %arg6: memref<1x32x16xf32, #tpu.memory_space<vmem>>, %arg7: memref<1x1x16xf32, #tpu.memory_space<vmem>>, %arg8: memref<2x16xf32, #tpu.memory_space<vmem>>, %arg9: memref<2x32xf32, #tpu.memory_space<vmem>>) attributes {dimension_semantics = [#tpu.dimension_semantics<arbitrary>, #tpu.dimension_semantics<arbitrary>], iteration_bounds = array<i64: 2, 2>, scalar_prefetch = 0 : i64, scratch_operands = 1 : i64, tpu.core_type = #tpu.core_type<tc>, window_params = [{transform_indices = @transform_0, window_bounds = array<i64: 1, 2, 8, 8>}, {transform_indices = @transform_1, window_bounds = array<i64: 1, 8, 1>}, {transform_indices = @transform_2, window_bounds = array<i64: 1, 8, 32>}, {transform_indices = @transform_3, window_bounds = array<i64: 1, 1, 32>}, {transform_indices = @transform_4, window_bounds = array<i64: 1, 32, 16>}, {transform_indices = @transform_5, window_bounds = array<i64: 1, 1, 16>}, {pipeline_mode = #tpu.pipeline_mode<synchronous>, transform_indices = @transform_6, window_bounds = array<i64: 2, 16>}]} {
    %c0_i32 = arith.constant 0 : i32
    %0 = arith.cmpi eq, %arg0, %c0_i32 : i32
    %c0_i32_0 = arith.constant 0 : i32
    %1 = arith.cmpi eq, %arg1, %c0_i32_0 : i32
    %2 = arith.andi %0, %1 : i1
    %3 = arith.extui %2 : i1 to i32
    %c0_i32_1 = arith.constant 0 : i32
    %4 = arith.cmpi ne, %3, %c0_i32_1 : i32
    scf.if %4 {
      %cst_23 = arith.constant 0.000000e+00 : f32
      %33 = vector.broadcast %cst_23 : f32 to vector<2x16xf32>
      %c0_24 = arith.constant 0 : index
      %c0_25 = arith.constant 0 : index
      %34 = vector.load %arg8[%c0_24, %c0_25] : memref<2x16xf32, #tpu.memory_space<vmem>>, vector<2x16xf32>
      tpu.vector_store %arg8[%c0_24, %c0_25], %33 {strides = array<i32>} : memref<2x16xf32, #tpu.memory_space<vmem>>, vector<2x16xf32>,
    } else {
    }
    %c0_i32_2 = arith.constant 0 : i32
    %5 = arith.cmpi eq, %arg1, %c0_i32_2 : i32
    %6 = arith.extui %5 : i1 to i32
    %c0_i32_3 = arith.constant 0 : i32
    %7 = arith.cmpi ne, %6, %c0_i32_3 : i32
    scf.if %7 {
      %cst_23 = arith.constant 0.000000e+00 : f32
      %33 = vector.broadcast %cst_23 : f32 to vector<2x32xf32>
      %c0_24 = arith.constant 0 : index
      %c0_25 = arith.constant 0 : index
      %34 = vector.load %arg9[%c0_24, %c0_25] : memref<2x32xf32, #tpu.memory_space<vmem>>, vector<2x32xf32>
      tpu.vector_store %arg9[%c0_24, %c0_25], %33 {strides = array<i32>} : memref<2x32xf32, #tpu.memory_space<vmem>>, vector<2x32xf32>,
    } else {
    }
    %c0 = arith.constant 0 : index
    %c0_4 = arith.constant 0 : index
    %c0_5 = arith.constant 0 : index
    %c0_6 = arith.constant 0 : index
    %8 = vector.load %arg2[%c0, %c0_4, %c0_5, %c0_6] : memref<1x2x8x8xbf16, #tpu.memory_space<vmem>>, vector<1x2x8x8xbf16>
    %9 = vector.shape_cast %8 : vector<1x2x8x8xbf16> to vector<2x8x8xbf16>
    %10 = vector.shape_cast %9 : vector<2x8x8xbf16> to vector<16x8xbf16>
    %c0_7 = arith.constant 0 : index
    %c0_8 = arith.constant 0 : index
    %c0_9 = arith.constant 0 : index
    %11 = vector.load %arg4[%c0_7, %c0_8, %c0_9] : memref<1x8x32xbf16, #tpu.memory_space<vmem>>, vector<1x8x32xbf16>
    %12 = vector.shape_cast %11 : vector<1x8x32xbf16> to vector<8x32xbf16>
    %cst = arith.constant dense<0.000000e+00> : vector<16x32xf32>
    %13 = tpu.matmul %10, %12, %cst {dimension_numbers = #tpu.dot_dimension_numbers<[1], [0], [0], [1], [0, 0, 1, 1], [], []>} : vector<16x8xbf16>, vector<8x32xbf16>, vector<16x32xf32> -> vector<16x32xf32>
    %c0_10 = arith.constant 0 : index
    %c0_11 = arith.constant 0 : index
    %c0_12 = arith.constant 0 : index
    %14 = vector.load %arg5[%c0_10, %c0_11, %c0_12] : memref<1x1x32xf32, #tpu.memory_space<vmem>>, vector<1x1x32xf32>
    %15 = vector.shape_cast %14 : vector<1x1x32xf32> to vector<1x32xf32>
    %16 = vector.broadcast %15 : vector<1x32xf32> to vector<16x32xf32>
    %17 = arith.addf %13, %16 : vector<16x32xf32>
    %cst_13 = arith.constant 0.000000e+00 : f32
    %18 = vector.broadcast %cst_13 : f32 to vector<16x32xf32>
    %19 = arith.maximumf %17, %18 : vector<16x32xf32>
    %20 = vector.shape_cast %19 : vector<16x32xf32> to vector<2x8x32xf32>
    %c0_14 = arith.constant 0 : index
    %c0_15 = arith.constant 0 : index
    %c0_16 = arith.constant 0 : index
    %21 = vector.load %arg3[%c0_14, %c0_15, %c0_16] : memref<1x8x1xf32, #tpu.memory_space<vmem>>, vector<1x8x1xf32>
    %22 = vector.shape_cast %21 : vector<1x8x1xf32> to vector<8x1xf32>
    %23 = vector.shape_cast %22 : vector<8x1xf32> to vector<1x8x1xf32>
    %24 = vector.broadcast %23 : vector<1x8x1xf32> to vector<2x8x32xf32>
    %25 = arith.mulf %20, %24 : vector<2x8x32xf32>
    %c0_17 = arith.constant 0 : index
    %c0_18 = arith.constant 0 : index
    %26 = vector.load %arg9[%c0_17, %c0_18] : memref<2x32xf32, #tpu.memory_space<vmem>>, vector<2x32xf32>
    %cst_19 = arith.constant dense<0.000000e+00> : vector<2x32xf32>
    %27 = vector.multi_reduction <add>, %25, %cst_19 [1] : vector<2x8x32xf32> to vector<2x32xf32>
    %28 = arith.addf %26, %27 : vector<2x32xf32>
    %c0_20 = arith.constant 0 : index
    %c0_21 = arith.constant 0 : index
    %29 = vector.load %arg9[%c0_20, %c0_21] : memref<2x32xf32, #tpu.memory_space<vmem>>, vector<2x32xf32>
    tpu.vector_store %arg9[%c0_20, %c0_21], %28 {strides = array<i32>} : memref<2x32xf32, #tpu.memory_space<vmem>>, vector<2x32xf32>,
    %c1_i32 = arith.constant 1 : i32
    %30 = arith.cmpi eq, %arg1, %c1_i32 : i32
    %31 = arith.extui %30 : i1 to i32
    %c0_i32_22 = arith.constant 0 : i32
    %32 = arith.cmpi ne, %31, %c0_i32_22 : i32
    scf.if %32 {
      %c0_23 = arith.constant 0 : index
      %c0_24 = arith.constant 0 : index
      %33 = vector.load %arg8[%c0_23, %c0_24] : memref<2x16xf32, #tpu.memory_space<vmem>>, vector<2x16xf32>
      %c0_25 = arith.constant 0 : index
      %c0_26 = arith.constant 0 : index
      %34 = vector.load %arg9[%c0_25, %c0_26] : memref<2x32xf32, #tpu.memory_space<vmem>>, vector<2x32xf32>
      %c0_27 = arith.constant 0 : index
      %c0_28 = arith.constant 0 : index
      %c0_29 = arith.constant 0 : index
      %35 = vector.load %arg6[%c0_27, %c0_28, %c0_29] : memref<1x32x16xf32, #tpu.memory_space<vmem>>, vector<1x32x16xf32>
      %36 = vector.shape_cast %35 : vector<1x32x16xf32> to vector<32x16xf32>
      %cst_30 = arith.constant dense<0.000000e+00> : vector<2x16xf32>
      %37 = tpu.matmul %34, %36, %cst_30 {dimension_numbers = #tpu.dot_dimension_numbers<[1], [0], [0], [1], [0, 0, 1, 1], [], []>} : vector<2x32xf32>, vector<32x16xf32>, vector<2x16xf32> -> vector<2x16xf32>
      %c0_31 = arith.constant 0 : index
      %c0_32 = arith.constant 0 : index
      %c0_33 = arith.constant 0 : index
      %38 = vector.load %arg7[%c0_31, %c0_32, %c0_33] : memref<1x1x16xf32, #tpu.memory_space<vmem>>, vector<1x1x16xf32>
      %39 = vector.shape_cast %38 : vector<1x1x16xf32> to vector<1x16xf32>
      %40 = vector.broadcast %39 : vector<1x16xf32> to vector<2x16xf32>
      %41 = arith.addf %37, %40 : vector<2x16xf32>
      %42 = arith.addf %33, %41 : vector<2x16xf32>
      %c0_34 = arith.constant 0 : index
      %c0_35 = arith.constant 0 : index
      %43 = vector.load %arg8[%c0_34, %c0_35] : memref<2x16xf32, #tpu.memory_space<vmem>>, vector<2x16xf32>
      tpu.vector_store %arg8[%c0_34, %c0_35], %42 {strides = array<i32>} : memref<2x16xf32, #tpu.memory_space<vmem>>, vector<2x16xf32>,
    } else {
    }
    return
  }
  func.func @transform_0(%arg0: i32, %arg1: i32) -> (i32, i32, i32, i32) {
    %c0_i32 = arith.constant 0 : i32
    %c0_i32_0 = arith.constant 0 : i32
    %c0_i32_1 = arith.constant 0 : i32
    return %arg0, %c0_i32, %arg1, %c0_i32_0 : i32, i32, i32, i32
  }
  func.func @transform_1(%arg0: i32, %arg1: i32) -> (i32, i32, i32) {
    %c0_i32 = arith.constant 0 : i32
    %c0_i32_0 = arith.constant 0 : i32
    return %arg0, %arg1, %c0_i32 : i32, i32, i32
  }
  func.func @transform_2(%arg0: i32, %arg1: i32) -> (i32, i32, i32) {
    %c0_i32 = arith.constant 0 : i32
    %c0_i32_0 = arith.constant 0 : i32
    %c0_i32_1 = arith.constant 0 : i32
    return %arg0, %c0_i32, %c0_i32_0 : i32, i32, i32
  }
  func.func @transform_3(%arg0: i32, %arg1: i32) -> (i32, i32, i32) {
    %c0_i32 = arith.constant 0 : i32
    %c0_i32_0 = arith.constant 0 : i32
    %c0_i32_1 = arith.constant 0 : i32
    return %arg0, %c0_i32, %c0_i32_0 : i32, i32, i32
  }
  func.func @transform_4(%arg0: i32, %arg1: i32) -> (i32, i32, i32) {
    %c0_i32 = arith.constant 0 : i32
    %c0_i32_0 = arith.constant 0 : i32
    %c0_i32_1 = arith.constant 0 : i32
    return %arg0, %c0_i32, %c0_i32_0 : i32, i32, i32
  }
  func.func @transform_5(%arg0: i32, %arg1: i32) -> (i32, i32, i32) {
    %c0_i32 = arith.constant 0 : i32
    %c0_i32_0 = arith.constant 0 : i32
    %c0_i32_1 = arith.constant 0 : i32
    return %arg0, %c0_i32, %c0_i32_0 : i32, i32, i32
  }
  func.func @transform_6(%arg0: i32, %arg1: i32) -> (i32, i32) {
    %c0_i32 = arith.constant 0 : i32
    %c0_i32_0 = arith.constant 0 : i32
    %c0_i32_1 = arith.constant 0 : i32
    return %c0_i32, %c0_i32_0 : i32, i32
  }
}

</mosaic_0001>

<llo_original>
// kernel: tpu_custom_call.1
$region0: #{tpu_custom_call.1}
  #allocation0 [shape = 'u32[]', space=smem, size = 0x4, offset = 0x4, fixed_abs, tag = 'smem constant byte address 0x4 - core index']
  #allocation1 [shape = 'u32[72,128]{1,0:T(1,128)}', space=vmem, size = 0x9000, scoped, tag = 'internal scratch']
  #allocation2 [shape = 'f32[2,32]{1,0:T(2,128)}', space=vmem, size = 0x400, scoped, tag = 'scratch operand']
  %s0 = inlined_call_operand.vmem [shape: bf16[2,2,16,8], index: 0, kind: input, shape index: {}]
  %s1 = inlined_call_operand.vmem [shape: f32[2,16,1], index: 1, kind: input, shape index: {}]
  %s2 = inlined_call_operand.vmem [shape: bf16[2,8,32], index: 2, kind: input, shape index: {}]
  %s3 = inlined_call_operand.vmem [shape: f32[2,1,32], index: 3, kind: input, shape index: {}]
  %s4 = inlined_call_operand.vmem [shape: f32[2,32,16], index: 4, kind: input, shape index: {}]
  %s5 = inlined_call_operand.vmem [shape: f32[2,1,16], index: 5, kind: input, shape index: {}]
  %s6 = inlined_call_operand.hbm [shape: f32[2,16], index: 6, kind: output, shape index: {}]
  %s7 = sld [smem:[#allocation0]]
  $region110: #{tpu_custom_call.1} parent=0
    _
  %s9 = ssub.s32 1, %s7
  %s10 = scalar_select 0, %s9, %s7
  $region1: #{tpu_custom_call.1} parent=0
    #allocation3 [shape = 'u8[8192]{0}', space=vmem, size = 0x2000, scoped, tag = 'input window, operand 0']
    #allocation4 [shape = 'u8[1024]{0}', space=vmem, size = 0x400, scoped, tag = 'output window, operand 0, single buffered']
    #allocation5 [shape = 's32[2]{0}', space=sflag, size = 0x8, scoped, tag = 'scoped memory for tpu_custom_call.1']
    %11 = vsyncpa [#allocation5], 0
    loop: start=0, step=1, limit=6
    $region2: #{tpu_custom_call.1} parent=1 // loop_pre_header
      _
    $region3: #{tpu_custom_call.1} parent=1 // loop_header
      %s13 = sphi 0, %s17
      %p14 = scmp.ge.s32.totalorder %s13, 6
      %s20 = sphi 0, %s32
      %s21 = sphi 0, %s28
      %s22 = sphi 0, %s20
      %s23 = sphi 0, %s21
      %s24 = sphi 0, %s22
      %s25 = sphi 0, %s23
      %s37 = sphi 0, %s39
      %s40 = sphi 0, %s37
      %s41 = sphi 0, %s40
      %s57 = sphi 0, %s41
      %s65 = sphi 0, %s67
      %s68 = sphi 0, %s65
      %s69 = sphi 0, %s68
      %s85 = sphi 0, %s69
      %s91 = sphi 0, %s93
      %s94 = sphi 0, %s91
      %s95 = sphi 0, %s94
      %s111 = sphi 0, %s95
      %s117 = sphi 0, %s119
      %s120 = sphi 0, %s117
      %s121 = sphi 0, %s120
      %s137 = sphi 0, %s121
      %s143 = sphi 0, %s145
      %s146 = sphi 0, %s143
      %s147 = sphi 0, %s146
      %s163 = sphi 0, %s147
      %s169 = sphi 0, %s171
      %s172 = sphi 0, %s169
      %s173 = sphi 0, %s172
      %s189 = sphi 0, %s173
      %s193 = sphi 0, %s193
      %s195 = sphi 0, %s193
      %s196 = sphi 0, %s195
      %s210 = sphi 0, %s196
    $region4: #{tpu_custom_call.1} parent=1 // loop_header_branch
      %16 = sbr.rel (%p14) target = $region8
    $region5: #{tpu_custom_call.1} parent=1 // loop_body
      %s18 = ssub.s32 %s13, 1
      %s19 = ssub.s32 %s13, 2
      %s26 = sadd.s32 1, %s21
      %p27 = scmp.ge.s32.totalorder %s26, 2
      %s28 = scalar_select %p27, 0, %s26
      %s29 = sadd.s32 1, %s20
      %s30 = scalar_select %p27, %s29, %s20
      %p31 = scmp.ge.s32.totalorder %s30, 2
      %s32 = scalar_select %p31, 0, %s30
      %s33 = ssub.s32 %s20, %s32
      %s34 = ssub.s32 %s21, %s28
      %s35 = sor.u32 %s33, %s34
      %p36 = scmp.eq.s32.totalorder %s35, 0
      %s38 = sadd.s32 %s37, 1
      %s39 = scalar_select %p36, %s37, %s38
      %p42 = pneg %p36
      %p43 = scmp.eq.s32.totalorder %s13, 3
      %p44 = por %p42, %p43
      %p45 = scmp.ne.s32.totalorder %s37, %s40
      %p46 = scmp.eq.s32.totalorder %s13, 0
      %p47 = por %p45, %p46
      %p48 = scmp.ne.s32.totalorder %s37, %s40
      %p49 = scmp.eq.s32.totalorder %s18, 3
      %p50 = por %p48, %p49
      %p51 = scmp.ne.s32.totalorder %s40, %s41
      %p52 = scmp.eq.s32.totalorder %s18, 0
      %p53 = por %p51, %p52
      %p54 = scmp.ne.s32.totalorder %s40, %s41
      %p55 = scmp.eq.s32.totalorder %s19, 3
      %p56 = por %p54, %p55
      %p58 = scmp.ne.s32.totalorder %s41, %s57
      %p59 = scmp.eq.s32.totalorder %s19, 0
      %p60 = por %p58, %p59
      %s61 = ssub.s32 %s20, %s32
      %s62 = ssub.s32 %s21, %s28
      %s63 = sor.u32 %s61, %s62
      %p64 = scmp.eq.s32.totalorder %s63, 0
      %s66 = sadd.s32 %s65, 1
      %s67 = scalar_select %p64, %s65, %s66
      %p70 = pneg %p64
      %p71 = scmp.eq.s32.totalorder %s13, 3
      %p72 = por %p70, %p71
      %p73 = scmp.ne.s32.totalorder %s65, %s68
      %p74 = scmp.eq.s32.totalorder %s13, 0
      %p75 = por %p73, %p74
      %p76 = scmp.ne.s32.totalorder %s65, %s68
      %p77 = scmp.eq.s32.totalorder %s18, 3
      %p78 = por %p76, %p77
      %p79 = scmp.ne.s32.totalorder %s68, %s69
      %p80 = scmp.eq.s32.totalorder %s18, 0
      %p81 = por %p79, %p80
      %p82 = scmp.ne.s32.totalorder %s68, %s69
      %p83 = scmp.eq.s32.totalorder %s19, 3
      %p84 = por %p82, %p83
      %p86 = scmp.ne.s32.totalorder %s69, %s85
      %p87 = scmp.eq.s32.totalorder %s19, 0
      %p88 = por %p86, %p87
      %s89 = ssub.s32 %s20, %s32
      %p90 = scmp.eq.s32.totalorder %s89, 0
      %s92 = sadd.s32 %s91, 1
      %s93 = scalar_select %p90, %s91, %s92
      %p96 = pneg %p90
      %p97 = scmp.eq.s32.totalorder %s13, 3
      %p98 = por %p96, %p97
      %p99 = scmp.ne.s32.totalorder %s91, %s94
      %p100 = scmp.eq.s32.totalorder %s13, 0
      %p101 = por %p99, %p100
      %p102 = scmp.ne.s32.totalorder %s91, %s94
      %p103 = scmp.eq.s32.totalorder %s18, 3
      %p104 = por %p102, %p103
      %p105 = scmp.ne.s32.totalorder %s94, %s95
      %p106 = scmp.eq.s32.totalorder %s18, 0
      %p107 = por %p105, %p106
      %p108 = scmp.ne.s32.totalorder %s94, %s95
      %p109 = scmp.eq.s32.totalorder %s19, 3
      %p110 = por %p108, %p109
      %p112 = scmp.ne.s32.totalorder %s95, %s111
      %p113 = scmp.eq.s32.totalorder %s19, 0
      %p114 = por %p112, %p113
      %s115 = ssub.s32 %s20, %s32
      %p116 = scmp.eq.s32.totalorder %s115, 0
      %s118 = sadd.s32 %s117, 1
      %s119 = scalar_select %p116, %s117, %s118
      %p122 = pneg %p116
      %p123 = scmp.eq.s32.totalorder %s13, 3
      %p124 = por %p122, %p123
      %p125 = scmp.ne.s32.totalorder %s117, %s120
      %p126 = scmp.eq.s32.totalorder %s13, 0
      %p127 = por %p125, %p126
      %p128 = scmp.ne.s32.totalorder %s117, %s120
      %p129 = scmp.eq.s32.totalorder %s18, 3
      %p130 = por %p128, %p129
      %p131 = scmp.ne.s32.totalorder %s120, %s121
      %p132 = scmp.eq.s32.totalorder %s18, 0
      %p133 = por %p131, %p132
      %p134 = scmp.ne.s32.totalorder %s120, %s121
      %p135 = scmp.eq.s32.totalorder %s19, 3
      %p136 = por %p134, %p135
      %p138 = scmp.ne.s32.totalorder %s121, %s137
      %p139 = scmp.eq.s32.totalorder %s19, 0
      %p140 = por %p138, %p139
      %s141 = ssub.s32 %s20, %s32
      %p142 = scmp.eq.s32.totalorder %s141, 0
      %s144 = sadd.s32 %s143, 1
      %s145 = scalar_select %p142, %s143, %s144
      %p148 = pneg %p142
      %p149 = scmp.eq.s32.totalorder %s13, 3
      %p150 = por %p148, %p149
      %p151 = scmp.ne.s32.totalorder %s143, %s146
      %p152 = scmp.eq.s32.totalorder %s13, 0
      %p153 = por %p151, %p152
      %p154 = scmp.ne.s32.totalorder %s143, %s146
      %p155 = scmp.eq.s32.totalorder %s18, 3
      %p156 = por %p154, %p155
      %p157 = scmp.ne.s32.totalorder %s146, %s147
      %p158 = scmp.eq.s32.totalorder %s18, 0
      %p159 = por %p157, %p158
      %p160 = scmp.ne.s32.totalorder %s146, %s147
      %p161 = scmp.eq.s32.totalorder %s19, 3
      %p162 = por %p160, %p161
      %p164 = scmp.ne.s32.totalorder %s147, %s163
      %p165 = scmp.eq.s32.totalorder %s19, 0
      %p166 = por %p164, %p165
      %s167 = ssub.s32 %s20, %s32
      %p168 = scmp.eq.s32.totalorder %s167, 0
      %s170 = sadd.s32 %s169, 1
      %s171 = scalar_select %p168, %s169, %s170
      %p174 = pneg %p168
      %p175 = scmp.eq.s32.totalorder %s13, 3
      %p176 = por %p174, %p175
      %p177 = scmp.ne.s32.totalorder %s169, %s172
      %p178 = scmp.eq.s32.totalorder %s13, 0
      %p179 = por %p177, %p178
      %p180 = scmp.ne.s32.totalorder %s169, %s172
      %p181 = scmp.eq.s32.totalorder %s18, 3
      %p182 = por %p180, %p181
      %p183 = scmp.ne.s32.totalorder %s172, %s173
      %p184 = scmp.eq.s32.totalorder %s18, 0
      %p185 = por %p183, %p184
      %p186 = scmp.ne.s32.totalorder %s172, %s173
      %p187 = scmp.eq.s32.totalorder %s19, 3
      %p188 = por %p186, %p187
      %p190 = scmp.ne.s32.totalorder %s173, %s189
      %p191 = scmp.eq.s32.totalorder %s19, 0
      %p192 = por %p190, %p191
      %s194 = sadd.s32 %s193, 1
      %p197 = scmp.eq.s32.totalorder %s13, 3
      %p198 = scmp.ne.s32.totalorder %s193, %s195
      %p199 = scmp.eq.s32.totalorder %s13, 0
      %p200 = por %p198, %p199
      %p201 = scmp.ne.s32.totalorder %s193, %s195
      %p202 = scmp.eq.s32.totalorder %s18, 3
      %p203 = por %p201, %p202
      %p204 = scmp.ne.s32.totalorder %s195, %s196
      %p205 = scmp.eq.s32.totalorder %s18, 0
      %p206 = por %p204, %p205
      %p207 = scmp.ne.s32.totalorder %s195, %s196
      %p208 = scmp.eq.s32.totalorder %s19, 3
      %p209 = por %p207, %p208
      %p211 = scmp.ne.s32.totalorder %s196, %s210
      %p212 = scmp.eq.s32.totalorder %s19, 0
      %p213 = por %p211, %p212
      %p214 = scmp.le.s32.totalorder 1, %s13
      %p215 = scmp.lt.s32.totalorder %s13, 5
      %p216 = pnand %p214, %p215
      %p217 = pneg %p216
      // Predicated region
      $region9: #{tpu_custom_call.1} parent=5 // pred_check
        _
      $region10: #{tpu_custom_call.1} parent=5 // pred_check_branch
        %219 = sbr.rel (%p216) target = $region12
      $region11: #{tpu_custom_call.1} parent=5 // pred_region
        %s220 = ssub.s32 %s13, 1
      $region12: #{tpu_custom_call.1} parent=5 // pred_fallthru
        _
      %p221 = scmp.lt.s32.totalorder %s13, 4
      // Predicated region
      $region13: #{tpu_custom_call.1} parent=5 // pred_check
        %p222 = pneg %p221
      $region14: #{tpu_custom_call.1} parent=5 // pred_check_branch
        %224 = sbr.rel (%p222) target = $region16
      $region15: #{tpu_custom_call.1} parent=5 // pred_region
        // Predicated region
        $region17: #{tpu_custom_call.1} parent=15 // pred_check
          %p225 = pneg %p47
        $region18: #{tpu_custom_call.1} parent=15 // pred_check_branch
          %227 = sbr.rel (%p225) target = $region20
        $region19: #{tpu_custom_call.1} parent=15 // pred_region
          %s228 = sand.u32 %s37, 1
          %s229 = sand.u32 %s37, 1
          %s230 = smul.addr %s229, 8
          %s231 = scalar_lea.vmem [#allocation3], %s230
          %s232 = smul.addr %s20, 4
          %s233 = sadd.s32 %s21, %s232
          %s234 = smul.addr %s233, 4
          %s235 = scalar_lea.vmem %s0, %s234
          // Predicated region
          $region21: #{tpu_custom_call.1} parent=19 // pred_check
            _
          $region22: #{tpu_custom_call.1} parent=19 // pred_check_branch
            %237 = sbr.rel (0) target = $region24
          $region23: #{tpu_custom_call.1} parent=19 // pred_region
            // Predicated region
            $region25: #{tpu_custom_call.1} parent=23 // pred_check
              _
            $region26: #{tpu_custom_call.1} parent=23 // pred_check_branch
              %239 = sbr.rel target = $region28
            $region27: #{tpu_custom_call.1} parent=23 // pred_region
              // Predicated region
              $region40: #{tpu_custom_call.1} parent=27 // pred_check
                _
              $region41: #{tpu_custom_call.1} parent=27 // pred_check_branch
                %257 = sbr.rel (0) target = $region43
              $region42: #{tpu_custom_call.1} parent=27 // pred_region
                loop: start=0, step=1, limit=1
                $region44: #{tpu_custom_call.1} parent=42 // loop_pre_header
                  _
                $region45: #{tpu_custom_call.1} parent=42 // loop_header
                  %s259 = sphi 0, %s263
                  %p260 = scmp.ge.s32.totalorder %s259, 1
                  %s264 = sphi %s235, %s235
                  %s265 = sphi %s231, %s231
                $region46: #{tpu_custom_call.1} parent=42 // loop_header_branch
                  %262 = sbr.rel (%p260) target = $region50
                $region47: #{tpu_custom_call.1} parent=42 // loop_body
                  _
                $region48: #{tpu_custom_call.1} parent=42 // loop_footer
                  %s263 = sadd.s32 1, %s259
                $region49: #{tpu_custom_call.1} parent=42 // loop_footer_branch
                  %258 = sbr.rel target = $region45
                $region50: #{tpu_custom_call.1} parent=42 // loop_exit
                  _
                %s267 = ssub.s32 16, 1
                loop: start=0, step=1, limit=1
                $region51: #{tpu_custom_call.1} parent=42 // loop_pre_header
                  _
                $region52: #{tpu_custom_call.1} parent=42 // loop_header
                  %s269 = sphi 0, %s273
                  %p270 = scmp.ge.s32.totalorder %s269, 1
                  %s274 = sphi %s235, %s235
                  %s275 = sphi %s231, %s231
                $region53: #{tpu_custom_call.1} parent=42 // loop_header_branch
                  %272 = sbr.rel (%p270) target = $region57
                $region54: #{tpu_custom_call.1} parent=42 // loop_body
                  %v276 = vld [vmem:[%s274] sm:%s267]
                  %277 = vst [vmem:[%s275] sm:%s267] %v276
                  %v278 = vld [vmem:[%s274 + $0x8] sm:%s267]
                  %279 = vst [vmem:[%s275 + $0x4] sm:%s267] %v278
                $region55: #{tpu_custom_call.1} parent=42 // loop_footer
                  %s273 = sadd.s32 1, %s269
                $region56: #{tpu_custom_call.1} parent=42 // loop_footer_branch
                  %268 = sbr.rel target = $region52
                $region57: #{tpu_custom_call.1} parent=42 // loop_exit
                  _
              $region43: #{tpu_custom_call.1} parent=27 // pred_fallthru
                _
            $region28: #{tpu_custom_call.1} parent=23 // pred_fallthru
              _
            // Predicated region
            $region29: #{tpu_custom_call.1} parent=23 // pred_check
              _
            $region30: #{tpu_custom_call.1} parent=23 // pred_check_branch
              %241 = sbr.rel (0) target = $region32
            $region31: #{tpu_custom_call.1} parent=23 // pred_region
              %s243 = ssub.s32 16, 1
              loop: start=0, step=1, limit=1
              $region33: #{tpu_custom_call.1} parent=31 // loop_pre_header
                _
              $region34: #{tpu_custom_call.1} parent=31 // loop_header
                %s245 = sphi 0, %s249
                %p246 = scmp.ge.s32.totalorder %s245, 1
                %s250 = sphi %s235, %s235
                %s251 = sphi %s231, %s231
              $region35: #{tpu_custom_call.1} parent=31 // loop_header_branch
                %248 = sbr.rel (%p246) target = $region39
              $region36: #{tpu_custom_call.1} parent=31 // loop_body
                %v252 = vld [vmem:[%s250] sm:%s243]
                %253 = vst [vmem:[%s251] sm:%s243] %v252
                %v254 = vld [vmem:[%s250 + $0x8] sm:%s243]
                %255 = vst [vmem:[%s251 + $0x4] sm:%s243] %v254
              $region37: #{tpu_custom_call.1} parent=31 // loop_footer
                %s249 = sadd.s32 1, %s245
              $region38: #{tpu_custom_call.1} parent=31 // loop_footer_branch
                %244 = sbr.rel target = $region34
              $region39: #{tpu_custom_call.1} parent=31 // loop_exit
                _
            $region32: #{tpu_custom_call.1} parent=23 // pred_fallthru
              _
          $region24: #{tpu_custom_call.1} parent=19 // pred_fallthru
            _
          %280 = vnop
        $region20: #{tpu_custom_call.1} parent=15 // pred_fallthru
          _
        // Predicated region
        $region58: #{tpu_custom_call.1} parent=15 // pred_check
          %p281 = pneg %p75
        $region59: #{tpu_custom_call.1} parent=15 // pred_check_branch
          %283 = sbr.rel (%p281) target = $region61
        $region60: #{tpu_custom_call.1} parent=15 // pred_region
          %p284 = scmp.lt.s32.totalorder %s20, 1
          %s285 = scalar_select %p284, %s20, 1
          %p286 = scmp.lt.s32.totalorder %s21, 1
          %s287 = scalar_select %p286, %s21, 1
          %s288 = smul.addr %s285, 2
          %s289 = sadd.s32 %s287, %s288
          %s290 = smul.addr %s289, 8
          %s291 = scalar_lea.vmem %s1, %s290
        $region61: #{tpu_custom_call.1} parent=15 // pred_fallthru
          _
        // Predicated region
        $region62: #{tpu_custom_call.1} parent=15 // pred_check
          %p292 = pneg %p101
        $region63: #{tpu_custom_call.1} parent=15 // pred_check_branch
          %294 = sbr.rel (%p292) target = $region65
        $region64: #{tpu_custom_call.1} parent=15 // pred_region
          %p295 = scmp.lt.s32.totalorder %s20, 1
          %s296 = scalar_select %p295, %s20, 1
          %s297 = smul.addr %s296, 4
          %s298 = scalar_lea.vmem %s2, %s297
        $region65: #{tpu_custom_call.1} parent=15 // pred_fallthru
          _
        // Predicated region
        $region66: #{tpu_custom_call.1} parent=15 // pred_check
          %p299 = pneg %p127
        $region67: #{tpu_custom_call.1} parent=15 // pred_check_branch
          %301 = sbr.rel (%p299) target = $region69
        $region68: #{tpu_custom_call.1} parent=15 // pred_region
          %p302 = scmp.lt.s32.totalorder %s20, 1
          %s303 = scalar_select %p302, %s20, 1
          %s304 = scalar_lea.vmem %s3, %s303
        $region69: #{tpu_custom_call.1} parent=15 // pred_fallthru
          _
        // Predicated region
        $region70: #{tpu_custom_call.1} parent=15 // pred_check
          %p305 = pneg %p153
        $region71: #{tpu_custom_call.1} parent=15 // pred_check_branch
          %307 = sbr.rel (%p305) target = $region73
        $region72: #{tpu_custom_call.1} parent=15 // pred_region
          %p308 = scmp.lt.s32.totalorder %s20, 1
          %s309 = scalar_select %p308, %s20, 1
          %s310 = smul.addr %s309, 4
          %s311 = smul.addr %s310, 8
          %s312 = scalar_lea.vmem %s4, %s311
        $region73: #{tpu_custom_call.1} parent=15 // pred_fallthru
          _
        // Predicated region
        $region74: #{tpu_custom_call.1} parent=15 // pred_check
          %p313 = pneg %p179
        $region75: #{tpu_custom_call.1} parent=15 // pred_check_branch
          %315 = sbr.rel (%p313) target = $region77
        $region76: #{tpu_custom_call.1} parent=15 // pred_region
          %p316 = scmp.lt.s32.totalorder %s20, 1
          %s317 = scalar_select %p316, %s20, 1
          %s318 = scalar_lea.vmem %s5, %s317
        $region77: #{tpu_custom_call.1} parent=15 // pred_fallthru
          _
      $region16: #{tpu_custom_call.1} parent=5 // pred_fallthru
        _
      %p319 = scmp.le.s32.totalorder 1, %s13
      %p320 = scmp.lt.s32.totalorder %s13, 5
      %p321 = pnand %p319, %p320
      %p322 = pneg %p321
      // Predicated region
      $region78: #{tpu_custom_call.1} parent=5 // pred_check
        _
      $region79: #{tpu_custom_call.1} parent=5 // pred_check_branch
        %324 = sbr.rel (%p321) target = $region81
      $region80: #{tpu_custom_call.1} parent=5 // pred_region
        %s325 = ssub.s32 %s13, 1
        %s326 = sand.u32 %s40, 1
        %s327 = sand.u32 %s40, 1
        %s328 = smul.addr %s327, 8
        %s329 = scalar_lea.vmem [#allocation3], %s328
        // Predicated region
        $region82: #{tpu_custom_call.1} parent=80 // pred_check
          %p330 = pneg %p53
        $region83: #{tpu_custom_call.1} parent=80 // pred_check_branch
          %332 = sbr.rel (%p330) target = $region85
        $region84: #{tpu_custom_call.1} parent=80 // pred_region
          _
        $region85: #{tpu_custom_call.1} parent=80 // pred_fallthru
          _
        %s333 = sand.u32 %s40, 1
        %s334 = sand.u32 %s40, 1
        %s335 = smul.addr %s334, 8
        %s336 = scalar_lea.vmem [#allocation3], %s335
        %p337 = pneg %p53
        %p338 = pneg %p50
        %p339 = scmp.lt.s32.totalorder %s22, 1
        %s340 = scalar_select %p339, %s22, 1
        %p341 = scmp.lt.s32.totalorder %s23, 1
        %s342 = scalar_select %p341, %s23, 1
        %s343 = smul.addr %s340, 2
        %s344 = sadd.s32 %s342, %s343
        %s345 = smul.addr %s344, 8
        %s346 = scalar_lea.vmem %s1, %s345
        %p347 = pneg %p81
        %p348 = pneg %p78
        %p349 = scmp.lt.s32.totalorder %s22, 1
        %s350 = scalar_select %p349, %s22, 1
        %s351 = smul.addr %s350, 4
        %s352 = scalar_lea.vmem %s2, %s351
        %p353 = pneg %p107
        %p354 = pneg %p104
        %p355 = scmp.lt.s32.totalorder %s22, 1
        %s356 = scalar_select %p355, %s22, 1
        %s357 = scalar_lea.vmem %s3, %s356
        %p358 = pneg %p133
        %p359 = pneg %p130
        %p360 = scmp.lt.s32.totalorder %s22, 1
        %s361 = scalar_select %p360, %s22, 1
        %s362 = smul.addr %s361, 4
        %s363 = smul.addr %s362, 8
        %s364 = scalar_lea.vmem %s4, %s363
        %p365 = pneg %p159
        %p366 = pneg %p156
        %p367 = scmp.lt.s32.totalorder %s22, 1
        %s368 = scalar_select %p367, %s22, 1
        %s369 = scalar_lea.vmem %s5, %s368
        %p370 = pneg %p185
        %p371 = pneg %p182
        %p372 = pneg %p206
        %p373 = pneg %p203
        %p374 = scmp.lt.s32.totalorder %s22, 1
        %s375 = scalar_select %p374, %s22, 1
        %p376 = scmp.lt.s32.totalorder %s23, 1
        %s377 = scalar_select %p376, %s23, 1
        %s378 = smul.addr %s375, 2
        %s379 = sadd.s32 %s377, %s378
        %s380 = smul.addr %s379, 8
        %s381 = scalar_lea.vmem %s1, %s380
        %p382 = scmp.lt.s32.totalorder %s22, 1
        %s383 = scalar_select %p382, %s22, 1
        %s384 = smul.addr %s383, 4
        %s385 = scalar_lea.vmem %s2, %s384
        %p386 = scmp.lt.s32.totalorder %s22, 1
        %s387 = scalar_select %p386, %s22, 1
        %s388 = scalar_lea.vmem %s3, %s387
        %p389 = scmp.lt.s32.totalorder %s22, 1
        %s390 = scalar_select %p389, %s22, 1
        %s391 = smul.addr %s390, 4
        %s392 = smul.addr %s391, 8
        %s393 = scalar_lea.vmem %s4, %s392
        %p394 = scmp.lt.s32.totalorder %s22, 1
        %s395 = scalar_select %p394, %s22, 1
        %s396 = scalar_lea.vmem %s5, %s395
        %p398 = scmp.eq.s32.totalorder %s22, 0
        %p399 = scmp.eq.s32.totalorder %s23, 0
        %p400 = pnand %p398, %p399
        %p401 = pneg %p400
        // Predicated region
        $region86: #{tpu_custom_call.1} parent=80 // pred_check
          _
        $region87: #{tpu_custom_call.1} parent=80 // pred_check_branch
          %403 = sbr.rel (%p400) target = $region89
        $region88: #{tpu_custom_call.1} parent=80 // pred_region
          %vm404 = vcmask 123904
          %405 = vst.msk [vmem:[#allocation4] sm:$0x3] %vm404, 0.0
        $region89: #{tpu_custom_call.1} parent=80 // pred_fallthru
          _
        // Predicated region
        $region90: #{tpu_custom_call.1} parent=80 // pred_check
          %p406 = pneg %p399
        $region91: #{tpu_custom_call.1} parent=80 // pred_check_branch
          %408 = sbr.rel (%p406) target = $region93
        $region92: #{tpu_custom_call.1} parent=80 // pred_region
          %vm409 = vcmask 254976
          %410 = vst.msk [vmem:[#allocation2] sm:$0x3] %vm409, 0.0
        $region93: #{tpu_custom_call.1} parent=80 // pred_fallthru
          _
        %v411 = vld [vmem:[%s329] sm:$0xf]
        %v412 = vld [vmem:[%s329 + $0x4] sm:$0xf]
        %v413 = vld [vmem:[%s385] sm:$0xf]
        %v414 = vld [vmem:[%s388] sm:$0x1]
        %v416 = vperm.slane %v414, 0
        %v420 = vunpack.c.l.b16 %v411
        %v421 = vunpack.c.l.b16 %v412
        %v422 = vpack.c.b16 %v421, %v420
        %vm423 = vcmask 64512
        %v425 = vsel %vm423, %v422, 0
        %vm427 = vcmask 1043456
        %v429 = vsel %vm427, %v413, 0
        %431 = vmatpush.bf16.msra.mxu0 0
        %432 = vmatpush.bf16.msra.mxu0 0
        %433 = vmatpush.bf16.msra.mxu0 0
        %434 = vmatpush.bf16.msra.mxu0 0
        %435 = vmatpush.bf16.msra.mxu0 0
        %436 = vmatpush.bf16.msra.mxu0 0
        %437 = vmatpush.bf16.msra.mxu0 0
        %438 = vmatpush.bf16.msra.mxu0 %v429
        %439 = vmatmul.bf16.gmra.mxu0 %v425
        %v440 = vpop.f32.mrf.mxu0
        %v441 = vadd.f32 %v416, %v440
        %v442 = vpop.f32.mrf.mxu0
        %v443 = vadd.f32 %v416, %v442
        %444 = vdwg.mxu0
        %v445 = vmax.f32 %v441, 0.0
        %v446 = vmax.f32 %v443, 0.0
        %v447 = vld [vmem:[%s381] sm:$0xff]
        %449 = vset.pattern.permute.xlu0 0
        %450 = vperm.xlu0 %449, %v447
        %v451 = vpop.permute.xlu0 %450
        %v453 = vmul.f32 %v445, %v451
        %v454 = vmul.f32 %v446, %v451
        %v455 = vld [vmem:[#allocation2] sm:$0x3]
        %vm456 = vcmask 261120
        %v457 = vsel %vm456, %v453, 0.0
        %v458 = vrot.slane %v457, 4
        %v459 = vadd.f32 %v457, %v458
        %v460 = vrot.slane %v459, 2
        %v461 = vadd.f32 %v459, %v460
        %v462 = vrot.slane %v461, 1
        %v463 = vadd.f32 %v461, %v462
        %v464 = vsel %vm456, %v454, 0.0
        %v465 = vrot.slane %v464, 4
        %v466 = vadd.f32 %v464, %v465
        %v467 = vrot.slane %v466, 2
        %v468 = vadd.f32 %v466, %v467
        %v469 = vrot.slane %v468, 1
        %v470 = vadd.f32 %v468, %v469
        %vm473 = vcmask 1041409
        %v474 = vsel %vm473, %v470, %v463
        %v476 = vadd.f32 %v455, %v474
        %vm477 = vcmask 254976
        %478 = vst.msk [vmem:[#allocation2] sm:$0x3] %vm477, %v476
        %p479 = scmp.eq.s32.totalorder %s23, 1
        // Predicated region
        $region94: #{tpu_custom_call.1} parent=80 // pred_check
          %p480 = pneg %p479
        $region95: #{tpu_custom_call.1} parent=80 // pred_check_branch
          %482 = sbr.rel (%p480) target = $region97
        $region96: #{tpu_custom_call.1} parent=80 // pred_region
          %v483 = vld [vmem:[#allocation4] sm:$0x3]
          %v484 = vld [vmem:[#allocation2] sm:$0x3]
          %v485 = vld [vmem:[%s393] sm:$0xff]
          %v486 = vld [vmem:[%s393 + $0x8] sm:$0xff]
          %v487 = vld [vmem:[%s393 + $0x10] sm:$0xff]
          %v488 = vld [vmem:[%s393 + $0x18] sm:$0xff]
          %v489 = vld [vmem:[%s396] sm:$0x1]
          %v491 = vperm.slane %v489, 0
          %v494 = vsel %vm456, %v484, 0
          %496 = vmatpush.msra.mxu0 0.0
          %497 = vmatpush.msra.mxu0 0.0
          %498 = vmatpush.msra.mxu0 0.0
          %499 = vmatpush.msra.mxu0 0.0
          %500 = vmatpush.msra.mxu0 0.0
          %501 = vmatpush.msra.mxu0 0.0
          %502 = vmatpush.msra.mxu0 0.0
          %503 = vmatpush.msra.mxu0 0.0
          %504 = vmatpush.msra.mxu0 0.0
          %505 = vmatpush.msra.mxu0 0.0
          %506 = vmatpush.msra.mxu0 0.0
          %507 = vmatpush.msra.mxu0 0.0
          %508 = vmatpush.msra.mxu0 %v488
          %509 = vmatpush.msra.mxu0 %v487
          %510 = vmatpush.msra.mxu0 %v486
          %511 = vmatpush.msra.mxu0 %v485
          %512 = vmatmul.f32.gmra.mxu0 %v494
          %v513 = vpop.f32.mrf.mxu0
          %v514 = vadd.f32 %v491, %v513
          %515 = vdwg.mxu0
          %v516 = vadd.f32 %v483, %v514
          %vm517 = vcmask 123904
          %518 = vst.msk [vmem:[#allocation4] sm:$0x3] %vm517, %v516
        $region97: #{tpu_custom_call.1} parent=80 // pred_fallthru
          _
        // Predicated region
        $region98: #{tpu_custom_call.1} parent=80 // pred_check
          %p519 = pneg %p203
        $region99: #{tpu_custom_call.1} parent=80 // pred_check_branch
          %521 = sbr.rel (%p519) target = $region101
        $region100: #{tpu_custom_call.1} parent=80 // pred_region
          %523 = vsyncadd [#allocation5], 0
          %s525 = sshll.u32 [#allocation4], 4
          %s526 = int_to_ptr.vmem [resolvable:$true] %s525
          %s527 = sshll.u32 %s6, 4
          %s528 = int_to_ptr.hbm [resolvable:$true] %s527
          %530 = dma.vmem_to_hbm [thread:$0]  %s526, 32, %s528, [#allocation5]
        $region101: #{tpu_custom_call.1} parent=80 // pred_fallthru
          _
        // Predicated region
        $region102: #{tpu_custom_call.1} parent=80 // pred_check
          %p531 = pneg %p203
        $region103: #{tpu_custom_call.1} parent=80 // pred_check_branch
          %533 = sbr.rel (%p531) target = $region105
        $region104: #{tpu_custom_call.1} parent=80 // pred_region
          %535 = dma.done [#allocation5], 32
        $region105: #{tpu_custom_call.1} parent=80 // pred_fallthru
          _
      $region81: #{tpu_custom_call.1} parent=5 // pred_fallthru
        _
      %p536 = scmp.le.s32.totalorder 2, %s13
      // Predicated region
      $region106: #{tpu_custom_call.1} parent=5 // pred_check
        %p537 = pneg %p536
      $region107: #{tpu_custom_call.1} parent=5 // pred_check_branch
        %539 = sbr.rel (%p537) target = $region109
      $region108: #{tpu_custom_call.1} parent=5 // pred_region
        %s540 = ssub.s32 %s13, 2
      $region109: #{tpu_custom_call.1} parent=5 // pred_fallthru
        _
    $region6: #{tpu_custom_call.1} parent=1 // loop_footer
      %s17 = sadd.s32 1, %s13
    $region7: #{tpu_custom_call.1} parent=1 // loop_footer_branch
      %12 = sbr.rel target = $region3
    $region8: #{tpu_custom_call.1} parent=1 // loop_exit
      _
    %541 = vsyncpa [#allocation5], 1
    %s542 = scalar_lea.sflag [#allocation5], 1
    %543 = vsyncpa %s542, 1

</llo_original>
